<compile_context>
chip_gen: v7x
topology: tpu7x:2x2x1
jax: 0.10.0
libtpu: 0.0.40
codegen_flags: <defaults>
</compile_context>

<pallas_src>
import jax
import jax.numpy as jnp
from jax.experimental import pallas as pl
from jax.experimental.pallas import tpu as pltpu

IN_FEATURES = 23
OUT_FEATURES = 1


def _round_up(n: int, m: int) -> int:
    return ((n + m - 1) // m) * m


def linear_kernel(x_ref, w_ref, b_ref, o_ref):
    # x_ref: (IN_FEATURES, TB)  VMEM   -- batch on the lane axis
    # w_ref: (IN_FEATURES, 1)   VMEM   -- broadcast across lanes
    # b_ref: (1, 1)             SMEM   -- scalar bias
    # o_ref: (1, TB)            VMEM   -- lane-dense output tile
    prod = x_ref[...] * w_ref[...]                  # VPU elementwise
    acc = jnp.sum(prod, axis=0, keepdims=True)      # XLU sublane reduce -> (1, TB)
    o_ref[...] = (acc + b_ref[0, 0]).astype(o_ref.dtype)


def linear_regression_forward(x, w_t, b, *, block_b=4096):
    """x: (B, 23) f32, w_t: (23, 1) f32, b: (1,) f32 -> (B, 1) f32.

    Matches torch: out = x @ W.T + b (w_t is the transposed torch weight).
    """
    B = x.shape[0]

    # Batch tile: multiple of 128 (lane width), capped at block_b, no larger
    # than the (lane-rounded) batch itself.
    tb = max(128, min(block_b, _round_up(B, 128)))
    B_pad = _round_up(B, tb)
    num_tiles = pl.cdiv(B_pad, tb)

    # Layout plumbing (not compute): pad batch and transpose so both the x
    # tiles and the output tiles are lane-dense.
    x_t = jnp.pad(x, ((0, B_pad - B), (0, 0))).T          # (23, B_pad)
    b_smem = b.reshape(1, 1).astype(jnp.float32)          # scalar in SMEM

    out_t = pl.pallas_call(
        linear_kernel,
        out_shape=jax.ShapeDtypeStruct((1, B_pad), x.dtype),
        grid_spec=pltpu.PrefetchScalarGridSpec(
            num_scalar_prefetch=0,
            grid=(num_tiles,),
            in_specs=[
                # (23, tb): first dim equals full array dim, last dim % 128 == 0.
                pl.BlockSpec((IN_FEATURES, tb), lambda i: (0, i)),
                # Whole (tiny) weight every step; index_map is constant so it
                # stays resident.
                pl.BlockSpec((IN_FEATURES, OUT_FEATURES), lambda i: (0, 0)),
                # Scalar bias lives in SMEM -- no VMEM tile, no per-step DMA.
                pl.BlockSpec(memory_space=pltpu.MemorySpace.SMEM),
            ],
            out_specs=pl.BlockSpec((1, tb), lambda i: (0, i)),
        ),
        compiler_params=pltpu.CompilerParams(
            # Batch tiles are independent -> shard across TCs on v7x.
            dimension_semantics=("parallel",),
        ),
    )(x_t, w_t, b_smem)                                    # (1, B_pad)

    return out_t[0, :B].reshape(B, OUT_FEATURES)


if __name__ == "__main__":
    key = jax.random.PRNGKey(0)
    k_x, k_w, k_b = jax.random.split(key, 3)

    B = 8
    x = jax.random.normal(k_x, (B, IN_FEATURES), dtype=jnp.float32)

    # Deterministic parameter init mimicking torch.nn.Linear default:
    # U(-1/sqrt(in_features), 1/sqrt(in_features))
    bound = 1.0 / jnp.sqrt(jnp.float32(IN_FEATURES))
    w = jax.random.uniform(k_w, (OUT_FEATURES, IN_FEATURES),
                           minval=-bound, maxval=bound, dtype=jnp.float32)
    b = jax.random.uniform(k_b, (OUT_FEATURES,),
                           minval=-bound, maxval=bound, dtype=jnp.float32)

    out = linear_regression_forward(x, w.T, b)
    out = jax.block_until_ready(out)

    ref = x @ w.T + b
    assert out.shape == (B, OUT_FEATURES)
    assert jnp.allclose(out, ref, atol=1e-5, rtol=1e-5)

    # Also exercise the multi-tile / padded-batch path (3 grid steps).
    B2 = 300
    x2 = jax.random.normal(k_x, (B2, IN_FEATURES), dtype=jnp.float32)
    out2 = jax.block_until_ready(
        linear_regression_forward(x2, w.T, b, block_b=128))
    ref2 = x2 @ w.T + b
    assert out2.shape == (B2, OUT_FEATURES)
    assert jnp.allclose(out2, ref2, atol=1e-5, rtol=1e-5)

    print("KERNEL_OK")
</pallas_src>

<mosaic_0001>
module attributes {stable_mosaic.version = 11 : i64} {
  func.func @linear_kernel(%arg0: i32, %arg1: memref<23x128xf32, #tpu.memory_space<vmem>>, %arg2: memref<23x1xf32, #tpu.memory_space<vmem>>, %arg3: memref<1x1xf32, #tpu.memory_space<smem>>, %arg4: memref<1x128xf32, #tpu.memory_space<vmem>>) attributes {dimension_semantics = [#tpu.dimension_semantics<parallel>], iteration_bounds = array<i64: 1>, scalar_prefetch = 0 : i64, scratch_operands = 0 : i64, tpu.core_type = #tpu.core_type<tc>, window_params = [{transform_indices = @transform_0, window_bounds = array<i64: 23, 128>}, {pipeline_mode = #tpu.pipeline_mode<synchronous>, transform_indices = @transform_1, window_bounds = array<i64: 23, 1>}, {transform_indices = @transform_2, window_bounds = array<i64: 1, 1>}, {transform_indices = @transform_3, window_bounds = array<i64: 1, 128>}]} {
    %c0 = arith.constant 0 : index
    %c0_0 = arith.constant 0 : index
    %0 = vector.load %arg1[%c0, %c0_0] : memref<23x128xf32, #tpu.memory_space<vmem>>, vector<23x128xf32>
    %c0_1 = arith.constant 0 : index
    %c0_2 = arith.constant 0 : index
    %1 = vector.load %arg2[%c0_1, %c0_2] : memref<23x1xf32, #tpu.memory_space<vmem>>, vector<23x1xf32>
    %2 = vector.broadcast %1 : vector<23x1xf32> to vector<23x128xf32>
    %3 = arith.mulf %0, %2 : vector<23x128xf32>
    %cst = arith.constant dense<0.000000e+00> : vector<128xf32>
    %4 = vector.multi_reduction <add>, %3, %cst [0] : vector<23x128xf32> to vector<128xf32>
    %5 = vector.shape_cast %4 : vector<128xf32> to vector<1x128xf32>
    %c0_3 = arith.constant 0 : index
    %c0_4 = arith.constant 0 : index
    %6 = memref.load %arg3[%c0_3, %c0_4] : memref<1x1xf32, #tpu.memory_space<smem>>
    %7 = vector.broadcast %6 : f32 to vector<1x128xf32>
    %8 = arith.addf %5, %7 : vector<1x128xf32>
    %c0_5 = arith.constant 0 : index
    %c0_6 = arith.constant 0 : index
    %9 = vector.load %arg4[%c0_5, %c0_6] : memref<1x128xf32, #tpu.memory_space<vmem>>, vector<1x128xf32>
    tpu.vector_store %arg4[%c0_5, %c0_6], %8 {strides = array<i32>} : memref<1x128xf32, #tpu.memory_space<vmem>>, vector<1x128xf32>,
    return
  }
  func.func @transform_0(%arg0: i32) -> (i32, i32) {
    %c0_i32 = arith.constant 0 : i32
    %c0_i32_0 = arith.constant 0 : i32
    return %c0_i32, %arg0 : i32, i32
  }
  func.func @transform_1(%arg0: i32) -> (i32, i32) {
    %c0_i32 = arith.constant 0 : i32
    %c0_i32_0 = arith.constant 0 : i32
    %c0_i32_1 = arith.constant 0 : i32
    return %c0_i32, %c0_i32_0 : i32, i32
  }
  func.func @transform_2(%arg0: i32) -> (i32, i32) {
    %c0_i32 = arith.constant 0 : i32
    %c0_i32_0 = arith.constant 0 : i32
    %c0_i32_1 = arith.constant 0 : i32
    return %c0_i32, %c0_i32_0 : i32, i32
  }
  func.func @transform_3(%arg0: i32) -> (i32, i32) {
    %c0_i32 = arith.constant 0 : i32
    %c0_i32_0 = arith.constant 0 : i32
    return %c0_i32, %arg0 : i32, i32
  }
}

</mosaic_0001>

<llo_original>
// kernel: tpu_custom_call.1
$region0: #{tpu_custom_call.1}
  #allocation0 [shape = 'u32[]', space=smem, size = 0x4, offset = 0x4, fixed_abs, tag = 'smem constant byte address 0x4 - core index']
  #allocation1 [shape = 'u32[144,128]{1,0:T(1,128)}', space=vmem, size = 0x12000, scoped, tag = 'internal scratch']
  #allocation2 [shape = 'f32[1,1]{1,0:T(1,128)S(6)}', space=smem, size = 0x200, scoped, tag = 'scoped memory for tpu_custom_call.1']
  %s0 = inlined_call_operand.vmem [shape: f32[23,128], index: 0, kind: input, shape index: {}]
  %s1 = inlined_call_operand.vmem [shape: f32[23,1], index: 1, kind: input, shape index: {}]
  %s2 = inlined_call_operand.<no memory space> [shape: f32[1,1], index: 2, kind: input, shape index: {}]
  %s3 = inlined_call_operand.hbm [shape: f32[1,128], index: 3, kind: output, shape index: {}]
  %s4 = sld [smem:[#allocation0]]
  $region22: #{tpu_custom_call.1} parent=0
    _
  %s6 = ssub.s32 1, %s4
  %s7 = scalar_select 0, %s6, %s4
  %8 = sst [smem:[#allocation2]] %s2
  $region1: #{tpu_custom_call.1} parent=0
    #allocation3 [shape = 'u8[512]{0}', space=vmem, size = 0x400, scoped, tag = 'output window, operand 0, single buffered']
    #allocation4 [shape = 's32[1]{0}', space=sflag, size = 0x4, scoped, tag = 'scoped memory for tpu_custom_call.1']
    %9 = vsyncpa [#allocation4], 0
    // Predicated region
    $region2: #{tpu_custom_call.1} parent=1 // pred_check
      _
    $region3: #{tpu_custom_call.1} parent=1 // pred_check_branch
      %11 = sbr.rel (0) target = $region5
    $region4: #{tpu_custom_call.1} parent=1 // pred_region
      _
    $region5: #{tpu_custom_call.1} parent=1 // pred_fallthru
      _
    // Predicated region
    $region6: #{tpu_custom_call.1} parent=1 // pred_check
      _
    $region7: #{tpu_custom_call.1} parent=1 // pred_check_branch
      %13 = sbr.rel (0) target = $region9
    $region8: #{tpu_custom_call.1} parent=1 // pred_region
      _
    $region9: #{tpu_custom_call.1} parent=1 // pred_fallthru
      _
    // Predicated region
    $region10: #{tpu_custom_call.1} parent=1 // pred_check
      _
    $region11: #{tpu_custom_call.1} parent=1 // pred_check_branch
      %15 = sbr.rel (0) target = $region13
    $region12: #{tpu_custom_call.1} parent=1 // pred_region
      _
    $region13: #{tpu_custom_call.1} parent=1 // pred_fallthru
      _
    %v16 = vld [vmem:[%s0] sm:$0xff]
    %v17 = vld [vmem:[%s0 + $0x8] sm:$0xff]
    %v18 = vld [vmem:[%s0 + $0x10] sm:$0x7f]
    %v19 = vld [vmem:[%s1] sm:$0xff]
    %v20 = vld [vmem:[%s1 + $0x8] sm:$0xff]
    %v21 = vld [vmem:[%s1 + $0x10] sm:$0x7f]
    %23 = vset.pattern.permute.xlu0 0
    %24 = vperm.xlu0 %23, %v19
    %v25 = vpop.permute.xlu0 %24
    %28 = vset.pattern.permute.xlu0 0
    %29 = vperm.xlu0 %28, %v20
    %v30 = vpop.permute.xlu0 %29
    %33 = vset.pattern.permute.xlu0 0
    %34 = vperm.xlu0 %33, %v21
    %v35 = vpop.permute.xlu0 %34
    %v37 = vmul.f32 %v16, %v25
    %v38 = vmul.f32 %v17, %v30
    %v39 = vmul.f32 %v18, %v35
    %v40 = vadd.f32 %v37, %v38
    %vm41 = vcmask 1046528
    %v42 = vsel %vm41, %v39, 0.0
    %v43 = vadd.f32 %v40, %v42
    %v44 = vrot.slane %v43, 4
    %v45 = vadd.f32 %v43, %v44
    %v46 = vrot.slane %v45, 2
    %v47 = vadd.f32 %v45, %v46
    %v48 = vrot.slane %v47, 1
    %v49 = vadd.f32 %v47, %v48
    %s50 = sld [smem:[#allocation2]]
    %v51 = vstv %s50
    %v52 = vadd.f32 %v49, %v51
    %53 = vst [vmem:[#allocation3] sm:$0x1] %v52
    // Predicated region
    $region14: #{tpu_custom_call.1} parent=1 // pred_check
      _
    $region15: #{tpu_custom_call.1} parent=1 // pred_check_branch
      %55 = sbr.rel (0) target = $region17
    $region16: #{tpu_custom_call.1} parent=1 // pred_region
      %s57 = ssub.s32 16, 16
      %58 = vsyncadd [#allocation4], %s57
      %s60 = sshll.u32 [#allocation3], 4
      %s61 = int_to_ptr.vmem [resolvable:$true] %s60
      %63 = dma.vmem_to_hbm [thread:$0]  %s61, 16, %s3, [#allocation4]
    $region17: #{tpu_custom_call.1} parent=1 // pred_fallthru
      _
    // Predicated region
    $region18: #{tpu_custom_call.1} parent=1 // pred_check
      _
    $region19: #{tpu_custom_call.1} parent=1 // pred_check_branch
      %65 = sbr.rel (0) target = $region21
    $region20: #{tpu_custom_call.1} parent=1 // pred_region
      %66 = dma.done [#allocation4], 16
    $region21: #{tpu_custom_call.1} parent=1 // pred_fallthru
      _
    %67 = vsyncpa [#allocation4], 1

</llo_original>
